<compile_context>
chip_gen: v7x
topology: tpu7x:2x2x1
jax: 0.10.0
libtpu: 0.0.40
codegen_flags: <defaults>
</compile_context>

<pallas_src>
import functools

import numpy as np
import jax
import jax.numpy as jnp
from jax.experimental import pallas as pl
from jax.experimental.pallas import tpu as pltpu


def _make_knots(degree, num_knots):
    return np.concatenate(
        [np.zeros(degree),
         np.linspace(0.0, 1.0, num_knots - degree + 1),
         np.ones(degree)]).astype(np.float64)


def _bspline_bases_dp(u, degree, num_knots, knots):
    """All top-level B-spline bases B_{i,degree}(u) for i in [0, num_knots).

    Bottom-up Cox-de Boor dynamic programming: each lower-order basis is evaluated exactly
    once (the naive recursion of the PyTorch module re-evaluates them ~2**degree times).
    `knots` is a tuple of Python floats, so zero-span checks, span reciprocals and the
    pruning of identically-zero bases are resolved at trace time.  Semantics match
    PRODBSplineLayerMultiFeature.basis_function.
    """
    t = knots
    n0 = num_knots + degree          # number of degree-0 bases feeding the DP
    u_minus_t = {}                   # cache of (u - t_val) factors
    t_minus_u = {}                   # cache of (t_val - u) factors

    def umt(v):
        if v == 0.0:
            return u
        if v not in u_minus_t:
            u_minus_t[v] = u - v
        return u_minus_t[v]

    def tmu(v):
        if v not in t_minus_u:
            t_minus_u[v] = v - u
        return t_minus_u[v]

    # degree 0: interval indicators; empty intervals (repeated knots) are statically zero.
    level = []
    for j in range(n0):
        if t[j] == t[j + 1]:
            level.append(None)
        else:
            level.append(((t[j] <= u) & (u < t[j + 1])).astype(jnp.float32))

    # degrees 1 .. degree
    for k in range(1, degree + 1):
        nxt = []
        for i in range(n0 - k):
            term = None
            d1 = t[i + k] - t[i]
            if d1 != 0.0 and level[i] is not None:
                term = (umt(t[i]) * (1.0 / d1)) * level[i]
            d2 = t[i + k + 1] - t[i + 1]
            if d2 != 0.0 and level[i + 1] is not None:
                right = (tmu(t[i + k + 1]) * (1.0 / d2)) * level[i + 1]
                term = right if term is None else term + right
            nxt.append(term)
        level = nxt
    return level                      # length == num_knots; entries are arrays or None


def _mps_kernel(xT_ref, w1_ref, b1_ref, cpT_ref, spb_ref, w2_ref, b2_ref, oT_ref,
                *, degree, num_knots, knots):
    # ln1 (transposed): h^T = W1 @ x^T + b1 -> (num_neurons, TILE_B), batch on lanes (MXU).
    hT = jnp.dot(w1_ref[...], xT_ref[...],
                 preferred_element_type=jnp.float32) + b1_ref[...]

    # NormLayer: per-sample min-max over the neuron (sublane) axis.
    mn = jnp.min(hT, axis=0, keepdims=True)
    mx = jnp.max(hT, axis=0, keepdims=True)
    # Exact divide (see header): guarantees u == 1.0 exactly at each sample's argmax neuron.
    u = (hT - mn) / (mx - mn)

    # PRODBSplineLayerMultiFeature (per-neuron spline):
    #   sp[n, b] = sum_i B_{i,degree}(u[n, b]) * control_p[i, n] + sp_bias[n]
    bases = _bspline_bases_dp(u, degree, num_knots, knots)
    cpT = cpT_ref[...]                                 # (num_neurons, num_knots)
    acc = None
    for i, b in enumerate(bases):
        if b is None:
            continue
        term = b * cpT[:, i:i + 1]                     # control-point column broadcast over batch lanes
        acc = term if acc is None else acc + term
    if acc is None:
        acc = jnp.zeros_like(u)
    spT = acc + spb_ref[...]

    # ln2 + ReLU (transposed): out^T = W2 @ sp^T + b2 -> (out_dim, TILE_B), lane-dense store.
    outT = jnp.dot(w2_ref[...], spT, preferred_element_type=jnp.float32) + b2_ref[...]
    oT_ref[...] = jnp.maximum(outT, 0.0)
    # TODO(synk): the PyTorch module also stashes intermediates in self.inter (basis matrix
    # transpose, sp1 output); they do not affect the forward output and are not produced here.


def mpsv3_forward(x, params, *, degree, num_knots, tile_b=1024):
    """Fused Pallas forward pass of MPSv3.

    `params` are in native PyTorch layout:
      w1:(num_neurons, input_dim), b1:(num_neurons,),
      control_p:(num_knots, num_neurons), sp_bias:(num_neurons,),
      w2:(output_dim, num_neurons), b2:(output_dim,).
    """
    w1, b1, cp, spb, w2, b2 = params
    batch, in_dim = x.shape
    n_neurons = w1.shape[0]
    out_dim = w2.shape[0]
    knots = tuple(float(v) for v in _make_knots(degree, num_knots))

    # Batch lives on the 128-wide lane axis: tile it and pad to a multiple of the tile.
    tb = min(int(tile_b), pl.cdiv(batch, 128) * 128)
    tb = max(128, (tb // 128) * 128)
    b_pad = pl.cdiv(batch, tb) * tb

    xT = jnp.pad(x.astype(jnp.float32).T, ((0, 0), (0, b_pad - batch)))
    w1m = w1.astype(jnp.float32)                        # (N, Din)
    b1c = b1.astype(jnp.float32).reshape(n_neurons, 1)
    cpT = cp.astype(jnp.float32).T                      # (N, K)
    spbc = spb.astype(jnp.float32).reshape(n_neurons, 1)
    w2m = w2.astype(jnp.float32)                        # (Dout, N)
    b2c = b2.astype(jnp.float32).reshape(out_dim, 1)

    kernel = functools.partial(_mps_kernel, degree=degree, num_knots=num_knots,
                               knots=knots)
    const2 = lambda i: (0, 0)
    outT = pl.pallas_call(
        kernel,
        out_shape=jax.ShapeDtypeStruct((out_dim, b_pad), jnp.float32),
        grid=(b_pad // tb,),
        in_specs=[
            pl.BlockSpec((in_dim, tb), lambda i: (0, i)),       # x^T: batch-tiled
            pl.BlockSpec((n_neurons, in_dim), const2),          # W1 (VMEM resident)
            pl.BlockSpec((n_neurons, 1), const2),               # b1
            pl.BlockSpec((n_neurons, num_knots), const2),       # control_p^T
            pl.BlockSpec((n_neurons, 1), const2),               # spline bias
            pl.BlockSpec((out_dim, n_neurons), const2),         # W2
            pl.BlockSpec((out_dim, 1), const2),                 # b2
        ],
        out_specs=pl.BlockSpec((out_dim, tb), lambda i: (0, i)),
        compiler_params=pltpu.CompilerParams(
            dimension_semantics=("parallel",),
            vmem_limit_bytes=32 * 1024 * 1024,
        ),
    )(xT, w1m, b1c, cpT, spbc, w2m, b2c)

    return outT[:, :batch].T


# ----------------------------- pure-JAX reference -----------------------------

def _basis_recursive(x, i, k, t):
    """Naive Cox-de Boor recursion, mirroring the PyTorch module (reference only)."""
    if k == 0:
        return ((t[i] <= x) & (x < t[i + 1])).astype(jnp.float32)
    denom1 = t[i + k] - t[i]
    denom2 = t[i + k + 1] - t[i + 1]
    term1 = 0.0
    if denom1 != 0:
        term1 = (x - t[i]) / denom1 * _basis_recursive(x, i, k - 1, t)
    term2 = 0.0
    if denom2 != 0:
        term2 = (t[i + k + 1] - x) / denom2 * _basis_recursive(x, i + 1, k - 1, t)
    return term1 + term2


def mpsv3_reference(x, params, *, degree, num_knots):
    """Pure-JAX reference (same math as the PyTorch module) for validation."""
    knots = tuple(float(v) for v in _make_knots(degree, num_knots))
    w1, b1, cp, spb, w2, b2 = params
    h = x @ w1.T + b1[None, :]
    mn = jnp.min(h, axis=1, keepdims=True)
    mx = jnp.max(h, axis=1, keepdims=True)
    u = (h - mn) / (mx - mn)
    acc = jnp.zeros_like(u)
    for i in range(num_knots):
        acc = acc + _basis_recursive(u, i, degree, knots) * cp[i:i + 1, :]
    sp = acc + spb[None, :]
    return jnp.maximum(sp @ w2.T + b2[None, :], 0.0)


if __name__ == "__main__":
    # Small shapes consistent with MPSv3(input_dim, degree, num_knots, num_neurons, output_dim, bias)
    batch, input_dim = 8, 4
    degree, num_knots, num_neurons, output_dim = 3, 8, 32, 4

    key = jax.random.PRNGKey(0)
    ks = jax.random.split(key, 7)
    x = jax.random.normal(ks[0], (batch, input_dim), dtype=jnp.float32)

    # Deterministic synthetic parameters in native PyTorch layout (nn.Linear weight = (out, in)).
    w1 = jax.random.normal(ks[1], (num_neurons, input_dim), dtype=jnp.float32) * 0.5
    b1 = jax.random.normal(ks[2], (num_neurons,), dtype=jnp.float32) * 0.1
    cp = jax.random.normal(ks[3], (num_knots, num_neurons), dtype=jnp.float32)     # sp1.control_p
    spb = jax.random.normal(ks[4], (num_neurons,), dtype=jnp.float32)              # sp1.bias
    w2 = jax.random.normal(ks[5], (output_dim, num_neurons), dtype=jnp.float32) * 0.5
    b2 = jax.random.normal(ks[6], (output_dim,), dtype=jnp.float32) * 0.1
    params = (w1, b1, cp, spb, w2, b2)

    out = mpsv3_forward(x, params, degree=degree, num_knots=num_knots)
    out = jax.block_until_ready(out)

    ref = mpsv3_reference(x, params, degree=degree, num_knots=num_knots)
    np.testing.assert_allclose(np.asarray(out), np.asarray(ref), rtol=2e-2, atol=2e-2)

    print("KERNEL_OK")
</pallas_src>

<mosaic_0001>
module attributes {stable_mosaic.version = 11 : i64} {
  func.func @_mps_kernel(%arg0: i32, %arg1: memref<4x128xf32, #tpu.memory_space<vmem>>, %arg2: memref<32x4xf32, #tpu.memory_space<vmem>>, %arg3: memref<32x1xf32, #tpu.memory_space<vmem>>, %arg4: memref<32x8xf32, #tpu.memory_space<vmem>>, %arg5: memref<32x1xf32, #tpu.memory_space<vmem>>, %arg6: memref<4x32xf32, #tpu.memory_space<vmem>>, %arg7: memref<4x1xf32, #tpu.memory_space<vmem>>, %arg8: memref<4x128xf32, #tpu.memory_space<vmem>>) attributes {dimension_semantics = [#tpu.dimension_semantics<parallel>], iteration_bounds = array<i64: 1>, scalar_prefetch = 0 : i64, scratch_operands = 0 : i64, tpu.core_type = #tpu.core_type<tc>, window_params = [{transform_indices = @transform_0, window_bounds = array<i64: 4, 128>}, {pipeline_mode = #tpu.pipeline_mode<synchronous>, transform_indices = @transform_1, window_bounds = array<i64: 32, 4>}, {pipeline_mode = #tpu.pipeline_mode<synchronous>, transform_indices = @transform_2, window_bounds = array<i64: 32, 1>}, {pipeline_mode = #tpu.pipeline_mode<synchronous>, transform_indices = @transform_3, window_bounds = array<i64: 32, 8>}, {pipeline_mode = #tpu.pipeline_mode<synchronous>, transform_indices = @transform_4, window_bounds = array<i64: 32, 1>}, {pipeline_mode = #tpu.pipeline_mode<synchronous>, transform_indices = @transform_5, window_bounds = array<i64: 4, 32>}, {pipeline_mode = #tpu.pipeline_mode<synchronous>, transform_indices = @transform_6, window_bounds = array<i64: 4, 1>}, {transform_indices = @transform_7, window_bounds = array<i64: 4, 128>}]} {
    %c0 = arith.constant 0 : index
    %c0_0 = arith.constant 0 : index
    %0 = vector.load %arg2[%c0, %c0_0] : memref<32x4xf32, #tpu.memory_space<vmem>>, vector<32x4xf32>
    %c0_1 = arith.constant 0 : index
    %c0_2 = arith.constant 0 : index
    %1 = vector.load %arg1[%c0_1, %c0_2] : memref<4x128xf32, #tpu.memory_space<vmem>>, vector<4x128xf32>
    %cst = arith.constant dense<0.000000e+00> : vector<32x128xf32>
    %2 = tpu.matmul %0, %1, %cst {dimension_numbers = #tpu.dot_dimension_numbers<[1], [0], [0], [1], [0, 0, 1, 1], [], []>} : vector<32x4xf32>, vector<4x128xf32>, vector<32x128xf32> -> vector<32x128xf32>
    %c0_3 = arith.constant 0 : index
    %c0_4 = arith.constant 0 : index
    %3 = vector.load %arg3[%c0_3, %c0_4] : memref<32x1xf32, #tpu.memory_space<vmem>>, vector<32x1xf32>
    %4 = vector.broadcast %3 : vector<32x1xf32> to vector<32x128xf32>
    %5 = arith.addf %2, %4 : vector<32x128xf32>
    %cst_5 = arith.constant dense<0x7F800000> : vector<128xf32>
    %6 = vector.multi_reduction <minimumf>, %5, %cst_5 [0] : vector<32x128xf32> to vector<128xf32>
    %7 = vector.shape_cast %6 : vector<128xf32> to vector<1x128xf32>
    %cst_6 = arith.constant dense<0xFF800000> : vector<128xf32>
    %8 = vector.multi_reduction <maximumf>, %5, %cst_6 [0] : vector<32x128xf32> to vector<128xf32>
    %9 = vector.shape_cast %8 : vector<128xf32> to vector<1x128xf32>
    %10 = vector.broadcast %7 : vector<1x128xf32> to vector<32x128xf32>
    %11 = arith.subf %5, %10 : vector<32x128xf32>
    %12 = arith.subf %9, %7 : vector<1x128xf32>
    %13 = vector.broadcast %12 : vector<1x128xf32> to vector<32x128xf32>
    %14 = arith.divf %11, %13 : vector<32x128xf32>
    %cst_7 = arith.constant 0.000000e+00 : f32
    %15 = vector.broadcast %cst_7 : f32 to vector<32x128xf32>
    %16 = arith.cmpf oge, %14, %15 : vector<32x128xf32>
    %cst_8 = arith.constant 2.000000e-01 : f32
    %17 = vector.broadcast %cst_8 : f32 to vector<32x128xf32>
    %18 = arith.cmpf olt, %14, %17 : vector<32x128xf32>
    %19 = arith.andi %16, %18 : vector<32x128xi1>
    %20 = arith.extui %19 : vector<32x128xi1> to vector<32x128xi32>
    %21 = arith.sitofp %20 : vector<32x128xi32> to vector<32x128xf32>
    %cst_9 = arith.constant 2.000000e-01 : f32
    %22 = vector.broadcast %cst_9 : f32 to vector<32x128xf32>
    %23 = arith.cmpf oge, %14, %22 : vector<32x128xf32>
    %cst_10 = arith.constant 4.000000e-01 : f32
    %24 = vector.broadcast %cst_10 : f32 to vector<32x128xf32>
    %25 = arith.cmpf olt, %14, %24 : vector<32x128xf32>
    %26 = arith.andi %23, %25 : vector<32x128xi1>
    %27 = arith.extui %26 : vector<32x128xi1> to vector<32x128xi32>
    %28 = arith.sitofp %27 : vector<32x128xi32> to vector<32x128xf32>
    %cst_11 = arith.constant 4.000000e-01 : f32
    %29 = vector.broadcast %cst_11 : f32 to vector<32x128xf32>
    %30 = arith.cmpf oge, %14, %29 : vector<32x128xf32>
    %cst_12 = arith.constant 6.000000e-01 : f32
    %31 = vector.broadcast %cst_12 : f32 to vector<32x128xf32>
    %32 = arith.cmpf olt, %14, %31 : vector<32x128xf32>
    %33 = arith.andi %30, %32 : vector<32x128xi1>
    %34 = arith.extui %33 : vector<32x128xi1> to vector<32x128xi32>
    %35 = arith.sitofp %34 : vector<32x128xi32> to vector<32x128xf32>
    %cst_13 = arith.constant 6.000000e-01 : f32
    %36 = vector.broadcast %cst_13 : f32 to vector<32x128xf32>
    %37 = arith.cmpf oge, %14, %36 : vector<32x128xf32>
    %cst_14 = arith.constant 8.000000e-01 : f32
    %38 = vector.broadcast %cst_14 : f32 to vector<32x128xf32>
    %39 = arith.cmpf olt, %14, %38 : vector<32x128xf32>
    %40 = arith.andi %37, %39 : vector<32x128xi1>
    %41 = arith.extui %40 : vector<32x128xi1> to vector<32x128xi32>
    %42 = arith.sitofp %41 : vector<32x128xi32> to vector<32x128xf32>
    %cst_15 = arith.constant 8.000000e-01 : f32
    %43 = vector.broadcast %cst_15 : f32 to vector<32x128xf32>
    %44 = arith.cmpf oge, %14, %43 : vector<32x128xf32>
    %cst_16 = arith.constant 1.000000e+00 : f32
    %45 = vector.broadcast %cst_16 : f32 to vector<32x128xf32>
    %46 = arith.cmpf olt, %14, %45 : vector<32x128xf32>
    %47 = arith.andi %44, %46 : vector<32x128xi1>
    %48 = arith.extui %47 : vector<32x128xi1> to vector<32x128xi32>
    %49 = arith.sitofp %48 : vector<32x128xi32> to vector<32x128xf32>
    %cst_17 = arith.constant 2.000000e-01 : f32
    %50 = vector.broadcast %cst_17 : f32 to vector<32x128xf32>
    %51 = arith.subf %50, %14 : vector<32x128xf32>
    %cst_18 = arith.constant 5.000000e+00 : f32
    %52 = vector.broadcast %cst_18 : f32 to vector<32x128xf32>
    %53 = arith.mulf %51, %52 : vector<32x128xf32>
    %54 = arith.mulf %53, %21 : vector<32x128xf32>
    %cst_19 = arith.constant 5.000000e+00 : f32
    %55 = vector.broadcast %cst_19 : f32 to vector<32x128xf32>
    %56 = arith.mulf %14, %55 : vector<32x128xf32>
    %57 = arith.mulf %56, %21 : vector<32x128xf32>
    %cst_20 = arith.constant 4.000000e-01 : f32
    %58 = vector.broadcast %cst_20 : f32 to vector<32x128xf32>
    %59 = arith.subf %58, %14 : vector<32x128xf32>
    %cst_21 = arith.constant 5.000000e+00 : f32
    %60 = vector.broadcast %cst_21 : f32 to vector<32x128xf32>
    %61 = arith.mulf %59, %60 : vector<32x128xf32>
    %62 = arith.mulf %61, %28 : vector<32x128xf32>
    %63 = arith.addf %57, %62 : vector<32x128xf32>
    %cst_22 = arith.constant 2.000000e-01 : f32
    %64 = vector.broadcast %cst_22 : f32 to vector<32x128xf32>
    %65 = arith.subf %14, %64 : vector<32x128xf32>
    %cst_23 = arith.constant 5.000000e+00 : f32
    %66 = vector.broadcast %cst_23 : f32 to vector<32x128xf32>
    %67 = arith.mulf %65, %66 : vector<32x128xf32>
    %68 = arith.mulf %67, %28 : vector<32x128xf32>
    %cst_24 = arith.constant 6.000000e-01 : f32
    %69 = vector.broadcast %cst_24 : f32 to vector<32x128xf32>
    %70 = arith.subf %69, %14 : vector<32x128xf32>
    %cst_25 = arith.constant 5.000000e+00 : f32
    %71 = vector.broadcast %cst_25 : f32 to vector<32x128xf32>
    %72 = arith.mulf %70, %71 : vector<32x128xf32>
    %73 = arith.mulf %72, %35 : vector<32x128xf32>
    %74 = arith.addf %68, %73 : vector<32x128xf32>
    %cst_26 = arith.constant 4.000000e-01 : f32
    %75 = vector.broadcast %cst_26 : f32 to vector<32x128xf32>
    %76 = arith.subf %14, %75 : vector<32x128xf32>
    %cst_27 = arith.constant 5.000000e+00 : f32
    %77 = vector.broadcast %cst_27 : f32 to vector<32x128xf32>
    %78 = arith.mulf %76, %77 : vector<32x128xf32>
    %79 = arith.mulf %78, %35 : vector<32x128xf32>
    %cst_28 = arith.constant 8.000000e-01 : f32
    %80 = vector.broadcast %cst_28 : f32 to vector<32x128xf32>
    %81 = arith.subf %80, %14 : vector<32x128xf32>
    %cst_29 = arith.constant 5.000000e+00 : f32
    %82 = vector.broadcast %cst_29 : f32 to vector<32x128xf32>
    %83 = arith.mulf %81, %82 : vector<32x128xf32>
    %84 = arith.mulf %83, %42 : vector<32x128xf32>
    %85 = arith.addf %79, %84 : vector<32x128xf32>
    %cst_30 = arith.constant 6.000000e-01 : f32
    %86 = vector.broadcast %cst_30 : f32 to vector<32x128xf32>
    %87 = arith.subf %14, %86 : vector<32x128xf32>
    %cst_31 = arith.constant 5.000000e+00 : f32
    %88 = vector.broadcast %cst_31 : f32 to vector<32x128xf32>
    %89 = arith.mulf %87, %88 : vector<32x128xf32>
    %90 = arith.mulf %89, %42 : vector<32x128xf32>
    %cst_32 = arith.constant 1.000000e+00 : f32
    %91 = vector.broadcast %cst_32 : f32 to vector<32x128xf32>
    %92 = arith.subf %91, %14 : vector<32x128xf32>
    %cst_33 = arith.constant 5.000000e+00 : f32
    %93 = vector.broadcast %cst_33 : f32 to vector<32x128xf32>
    %94 = arith.mulf %92, %93 : vector<32x128xf32>
    %95 = arith.mulf %94, %49 : vector<32x128xf32>
    %96 = arith.addf %90, %95 : vector<32x128xf32>
    %cst_34 = arith.constant 8.000000e-01 : f32
    %97 = vector.broadcast %cst_34 : f32 to vector<32x128xf32>
    %98 = arith.subf %14, %97 : vector<32x128xf32>
    %cst_35 = arith.constant 5.000000e+00 : f32
    %99 = vector.broadcast %cst_35 : f32 to vector<32x128xf32>
    %100 = arith.mulf %98, %99 : vector<32x128xf32>
    %101 = arith.mulf %100, %49 : vector<32x128xf32>
    %cst_36 = arith.constant 5.000000e+00 : f32
    %102 = vector.broadcast %cst_36 : f32 to vector<32x128xf32>
    %103 = arith.mulf %51, %102 : vector<32x128xf32>
    %104 = arith.mulf %103, %54 : vector<32x128xf32>
    %cst_37 = arith.constant 5.000000e+00 : f32
    %105 = vector.broadcast %cst_37 : f32 to vector<32x128xf32>
    %106 = arith.mulf %14, %105 : vector<32x128xf32>
    %107 = arith.mulf %106, %54 : vector<32x128xf32>
    %cst_38 = arith.constant 2.500000e+00 : f32
    %108 = vector.broadcast %cst_38 : f32 to vector<32x128xf32>
    %109 = arith.mulf %59, %108 : vector<32x128xf32>
    %110 = arith.mulf %109, %63 : vector<32x128xf32>
    %111 = arith.addf %107, %110 : vector<32x128xf32>
    %cst_39 = arith.constant 2.500000e+00 : f32
    %112 = vector.broadcast %cst_39 : f32 to vector<32x128xf32>
    %113 = arith.mulf %14, %112 : vector<32x128xf32>
    %114 = arith.mulf %113, %63 : vector<32x128xf32>
    %cst_40 = arith.constant 2.500000e+00 : f32
    %115 = vector.broadcast %cst_40 : f32 to vector<32x128xf32>
    %116 = arith.mulf %70, %115 : vector<32x128xf32>
    %117 = arith.mulf %116, %74 : vector<32x128xf32>
    %118 = arith.addf %114, %117 : vector<32x128xf32>
    %cst_41 = arith.constant 2.500000e+00 : f32
    %119 = vector.broadcast %cst_41 : f32 to vector<32x128xf32>
    %120 = arith.mulf %65, %119 : vector<32x128xf32>
    %121 = arith.mulf %120, %74 : vector<32x128xf32>
    %cst_42 = arith.constant 2.500000e+00 : f32
    %122 = vector.broadcast %cst_42 : f32 to vector<32x128xf32>
    %123 = arith.mulf %81, %122 : vector<32x128xf32>
    %124 = arith.mulf %123, %85 : vector<32x128xf32>
    %125 = arith.addf %121, %124 : vector<32x128xf32>
    %cst_43 = arith.constant 2.500000e+00 : f32
    %126 = vector.broadcast %cst_43 : f32 to vector<32x128xf32>
    %127 = arith.mulf %76, %126 : vector<32x128xf32>
    %128 = arith.mulf %127, %85 : vector<32x128xf32>
    %cst_44 = arith.constant 2.500000e+00 : f32
    %129 = vector.broadcast %cst_44 : f32 to vector<32x128xf32>
    %130 = arith.mulf %92, %129 : vector<32x128xf32>
    %131 = arith.mulf %130, %96 : vector<32x128xf32>
    %132 = arith.addf %128, %131 : vector<32x128xf32>
    %cst_45 = arith.constant 2.500000e+00 : f32
    %133 = vector.broadcast %cst_45 : f32 to vector<32x128xf32>
    %134 = arith.mulf %87, %133 : vector<32x128xf32>
    %135 = arith.mulf %134, %96 : vector<32x128xf32>
    %cst_46 = arith.constant 5.000000e+00 : f32
    %136 = vector.broadcast %cst_46 : f32 to vector<32x128xf32>
    %137 = arith.mulf %92, %136 : vector<32x128xf32>
    %138 = arith.mulf %137, %101 : vector<32x128xf32>
    %139 = arith.addf %135, %138 : vector<32x128xf32>
    %cst_47 = arith.constant 5.000000e+00 : f32
    %140 = vector.broadcast %cst_47 : f32 to vector<32x128xf32>
    %141 = arith.mulf %98, %140 : vector<32x128xf32>
    %142 = arith.mulf %141, %101 : vector<32x128xf32>
    %cst_48 = arith.constant 5.000000e+00 : f32
    %143 = vector.broadcast %cst_48 : f32 to vector<32x128xf32>
    %144 = arith.mulf %51, %143 : vector<32x128xf32>
    %145 = arith.mulf %144, %104 : vector<32x128xf32>
    %cst_49 = arith.constant 5.000000e+00 : f32
    %146 = vector.broadcast %cst_49 : f32 to vector<32x128xf32>
    %147 = arith.mulf %14, %146 : vector<32x128xf32>
    %148 = arith.mulf %147, %104 : vector<32x128xf32>
    %cst_50 = arith.constant 2.500000e+00 : f32
    %149 = vector.broadcast %cst_50 : f32 to vector<32x128xf32>
    %150 = arith.mulf %59, %149 : vector<32x128xf32>
    %151 = arith.mulf %150, %111 : vector<32x128xf32>
    %152 = arith.addf %148, %151 : vector<32x128xf32>
    %cst_51 = arith.constant 2.500000e+00 : f32
    %153 = vector.broadcast %cst_51 : f32 to vector<32x128xf32>
    %154 = arith.mulf %14, %153 : vector<32x128xf32>
    %155 = arith.mulf %154, %111 : vector<32x128xf32>
    %cst_52 = arith.constant 1.66666663 : f32
    %156 = vector.broadcast %cst_52 : f32 to vector<32x128xf32>
    %157 = arith.mulf %70, %156 : vector<32x128xf32>
    %158 = arith.mulf %157, %118 : vector<32x128xf32>
    %159 = arith.addf %155, %158 : vector<32x128xf32>
    %cst_53 = arith.constant 1.66666663 : f32
    %160 = vector.broadcast %cst_53 : f32 to vector<32x128xf32>
    %161 = arith.mulf %14, %160 : vector<32x128xf32>
    %162 = arith.mulf %161, %118 : vector<32x128xf32>
    %cst_54 = arith.constant 1.66666663 : f32
    %163 = vector.broadcast %cst_54 : f32 to vector<32x128xf32>
    %164 = arith.mulf %81, %163 : vector<32x128xf32>
    %165 = arith.mulf %164, %125 : vector<32x128xf32>
    %166 = arith.addf %162, %165 : vector<32x128xf32>
    %cst_55 = arith.constant 1.66666663 : f32
    %167 = vector.broadcast %cst_55 : f32 to vector<32x128xf32>
    %168 = arith.mulf %65, %167 : vector<32x128xf32>
    %169 = arith.mulf %168, %125 : vector<32x128xf32>
    %cst_56 = arith.constant 1.66666663 : f32
    %170 = vector.broadcast %cst_56 : f32 to vector<32x128xf32>
    %171 = arith.mulf %92, %170 : vector<32x128xf32>
    %172 = arith.mulf %171, %132 : vector<32x128xf32>
    %173 = arith.addf %169, %172 : vector<32x128xf32>
    %cst_57 = arith.constant 1.66666663 : f32
    %174 = vector.broadcast %cst_57 : f32 to vector<32x128xf32>
    %175 = arith.mulf %76, %174 : vector<32x128xf32>
    %176 = arith.mulf %175, %132 : vector<32x128xf32>
    %cst_58 = arith.constant 2.500000e+00 : f32
    %177 = vector.broadcast %cst_58 : f32 to vector<32x128xf32>
    %178 = arith.mulf %92, %177 : vector<32x128xf32>
    %179 = arith.mulf %178, %139 : vector<32x128xf32>
    %180 = arith.addf %176, %179 : vector<32x128xf32>
    %cst_59 = arith.constant 2.500000e+00 : f32
    %181 = vector.broadcast %cst_59 : f32 to vector<32x128xf32>
    %182 = arith.mulf %87, %181 : vector<32x128xf32>
    %183 = arith.mulf %182, %139 : vector<32x128xf32>
    %cst_60 = arith.constant 5.000000e+00 : f32
    %184 = vector.broadcast %cst_60 : f32 to vector<32x128xf32>
    %185 = arith.mulf %92, %184 : vector<32x128xf32>
    %186 = arith.mulf %185, %142 : vector<32x128xf32>
    %187 = arith.addf %183, %186 : vector<32x128xf32>
    %cst_61 = arith.constant 5.000000e+00 : f32
    %188 = vector.broadcast %cst_61 : f32 to vector<32x128xf32>
    %189 = arith.mulf %98, %188 : vector<32x128xf32>
    %190 = arith.mulf %189, %142 : vector<32x128xf32>
    %c0_62 = arith.constant 0 : index
    %c0_63 = arith.constant 0 : index
    %191 = vector.load %arg4[%c0_62, %c0_63] : memref<32x8xf32, #tpu.memory_space<vmem>>, vector<32x8xf32>
    %192 = vector.extract_strided_slice %191 {offsets = [0, 0], sizes = [32, 1], strides = [1, 1]} : vector<32x8xf32> to vector<32x1xf32>
    %193 = vector.broadcast %192 : vector<32x1xf32> to vector<32x128xf32>
    %194 = arith.mulf %145, %193 : vector<32x128xf32>
    %195 = vector.extract_strided_slice %191 {offsets = [0, 1], sizes = [32, 1], strides = [1, 1]} : vector<32x8xf32> to vector<32x1xf32>
    %196 = vector.broadcast %195 : vector<32x1xf32> to vector<32x128xf32>
    %197 = arith.mulf %152, %196 : vector<32x128xf32>
    %198 = arith.addf %194, %197 : vector<32x128xf32>
    %199 = vector.extract_strided_slice %191 {offsets = [0, 2], sizes = [32, 1], strides = [1, 1]} : vector<32x8xf32> to vector<32x1xf32>
    %200 = vector.broadcast %199 : vector<32x1xf32> to vector<32x128xf32>
    %201 = arith.mulf %159, %200 : vector<32x128xf32>
    %202 = arith.addf %198, %201 : vector<32x128xf32>
    %203 = vector.extract_strided_slice %191 {offsets = [0, 3], sizes = [32, 1], strides = [1, 1]} : vector<32x8xf32> to vector<32x1xf32>
    %204 = vector.broadcast %203 : vector<32x1xf32> to vector<32x128xf32>
    %205 = arith.mulf %166, %204 : vector<32x128xf32>
    %206 = arith.addf %202, %205 : vector<32x128xf32>
    %207 = vector.extract_strided_slice %191 {offsets = [0, 4], sizes = [32, 1], strides = [1, 1]} : vector<32x8xf32> to vector<32x1xf32>
    %208 = vector.broadcast %207 : vector<32x1xf32> to vector<32x128xf32>
    %209 = arith.mulf %173, %208 : vector<32x128xf32>
    %210 = arith.addf %206, %209 : vector<32x128xf32>
    %211 = vector.extract_strided_slice %191 {offsets = [0, 5], sizes = [32, 1], strides = [1, 1]} : vector<32x8xf32> to vector<32x1xf32>
    %212 = vector.broadcast %211 : vector<32x1xf32> to vector<32x128xf32>
    %213 = arith.mulf %180, %212 : vector<32x128xf32>
    %214 = arith.addf %210, %213 : vector<32x128xf32>
    %215 = vector.extract_strided_slice %191 {offsets = [0, 6], sizes = [32, 1], strides = [1, 1]} : vector<32x8xf32> to vector<32x1xf32>
    %216 = vector.broadcast %215 : vector<32x1xf32> to vector<32x128xf32>
    %217 = arith.mulf %187, %216 : vector<32x128xf32>
    %218 = arith.addf %214, %217 : vector<32x128xf32>
    %219 = vector.extract_strided_slice %191 {offsets = [0, 7], sizes = [32, 1], strides = [1, 1]} : vector<32x8xf32> to vector<32x1xf32>
    %220 = vector.broadcast %219 : vector<32x1xf32> to vector<32x128xf32>
    %221 = arith.mulf %190, %220 : vector<32x128xf32>
    %222 = arith.addf %218, %221 : vector<32x128xf32>
    %c0_64 = arith.constant 0 : index
    %c0_65 = arith.constant 0 : index
    %223 = vector.load %arg5[%c0_64, %c0_65] : memref<32x1xf32, #tpu.memory_space<vmem>>, vector<32x1xf32>
    %224 = vector.broadcast %223 : vector<32x1xf32> to vector<32x128xf32>
    %225 = arith.addf %222, %224 : vector<32x128xf32>
    %c0_66 = arith.constant 0 : index
    %c0_67 = arith.constant 0 : index
    %226 = vector.load %arg6[%c0_66, %c0_67] : memref<4x32xf32, #tpu.memory_space<vmem>>, vector<4x32xf32>
    %cst_68 = arith.constant dense<0.000000e+00> : vector<4x128xf32>
    %227 = tpu.matmul %226, %225, %cst_68 {dimension_numbers = #tpu.dot_dimension_numbers<[1], [0], [0], [1], [0, 0, 1, 1], [], []>} : vector<4x32xf32>, vector<32x128xf32>, vector<4x128xf32> -> vector<4x128xf32>
    %c0_69 = arith.constant 0 : index
    %c0_70 = arith.constant 0 : index
    %228 = vector.load %arg7[%c0_69, %c0_70] : memref<4x1xf32, #tpu.memory_space<vmem>>, vector<4x1xf32>
    %229 = vector.broadcast %228 : vector<4x1xf32> to vector<4x128xf32>
    %230 = arith.addf %227, %229 : vector<4x128xf32>
    %cst_71 = arith.constant 0.000000e+00 : f32
    %231 = vector.broadcast %cst_71 : f32 to vector<4x128xf32>
    %232 = arith.maximumf %230, %231 : vector<4x128xf32>
    %c0_72 = arith.constant 0 : index
    %c0_73 = arith.constant 0 : index
    %233 = vector.load %arg8[%c0_72, %c0_73] : memref<4x128xf32, #tpu.memory_space<vmem>>, vector<4x128xf32>
    tpu.vector_store %arg8[%c0_72, %c0_73], %232 {strides = array<i32>} : memref<4x128xf32, #tpu.memory_space<vmem>>, vector<4x128xf32>,
    return
  }
  func.func @transform_0(%arg0: i32) -> (i32, i32) {
    %c0_i32 = arith.constant 0 : i32
    %c0_i32_0 = arith.constant 0 : i32
    return %c0_i32, %arg0 : i32, i32
  }
  func.func @transform_1(%arg0: i32) -> (i32, i32) {
    %c0_i32 = arith.constant 0 : i32
    %c0_i32_0 = arith.constant 0 : i32
    %c0_i32_1 = arith.constant 0 : i32
    return %c0_i32, %c0_i32_0 : i32, i32
  }
  func.func @transform_2(%arg0: i32) -> (i32, i32) {
    %c0_i32 = arith.constant 0 : i32
    %c0_i32_0 = arith.constant 0 : i32
    %c0_i32_1 = arith.constant 0 : i32
    return %c0_i32, %c0_i32_0 : i32, i32
  }
  func.func @transform_3(%arg0: i32) -> (i32, i32) {
    %c0_i32 = arith.constant 0 : i32
    %c0_i32_0 = arith.constant 0 : i32
    %c0_i32_1 = arith.constant 0 : i32
    return %c0_i32, %c0_i32_0 : i32, i32
  }
  func.func @transform_4(%arg0: i32) -> (i32, i32) {
    %c0_i32 = arith.constant 0 : i32
    %c0_i32_0 = arith.constant 0 : i32
    %c0_i32_1 = arith.constant 0 : i32
    return %c0_i32, %c0_i32_0 : i32, i32
  }
  func.func @transform_5(%arg0: i32) -> (i32, i32) {
    %c0_i32 = arith.constant 0 : i32
    %c0_i32_0 = arith.constant 0 : i32
    %c0_i32_1 = arith.constant 0 : i32
    return %c0_i32, %c0_i32_0 : i32, i32
  }
  func.func @transform_6(%arg0: i32) -> (i32, i32) {
    %c0_i32 = arith.constant 0 : i32
    %c0_i32_0 = arith.constant 0 : i32
    %c0_i32_1 = arith.constant 0 : i32
    return %c0_i32, %c0_i32_0 : i32, i32
  }
  func.func @transform_7(%arg0: i32) -> (i32, i32) {
    %c0_i32 = arith.constant 0 : i32
    %c0_i32_0 = arith.constant 0 : i32
    return %c0_i32, %arg0 : i32, i32
  }
}

</mosaic_0001>

<llo_original>
// kernel: tpu_custom_call.1
$region0: #{tpu_custom_call.1}
  #allocation0 [shape = 'u32[]', space=smem, size = 0x4, offset = 0x4, fixed_abs, tag = 'smem constant byte address 0x4 - core index']
  #allocation1 [shape = 'u32[144,128]{1,0:T(1,128)}', space=vmem, size = 0x12000, scoped, tag = 'internal scratch']
  %s0 = inlined_call_operand.vmem [shape: f32[4,128], index: 0, kind: input, shape index: {}]
  %s1 = inlined_call_operand.vmem [shape: f32[32,4], index: 1, kind: input, shape index: {}]
  %s2 = inlined_call_operand.vmem [shape: f32[32,1], index: 2, kind: input, shape index: {}]
  %s3 = inlined_call_operand.vmem [shape: f32[32,8], index: 3, kind: input, shape index: {}]
  %s4 = inlined_call_operand.vmem [shape: f32[32,1], index: 4, kind: input, shape index: {}]
  %s5 = inlined_call_operand.vmem [shape: f32[4,32], index: 5, kind: input, shape index: {}]
  %s6 = inlined_call_operand.vmem [shape: f32[4,1], index: 6, kind: input, shape index: {}]
  %s7 = inlined_call_operand.hbm [shape: f32[4,128], index: 7, kind: output, shape index: {}]
  %s8 = sld [smem:[#allocation0]]
  $region38: #{tpu_custom_call.1} parent=0
    _
  %s10 = ssub.s32 1, %s8
  %s11 = scalar_select 0, %s10, %s8
  $region1: #{tpu_custom_call.1} parent=0
    #allocation2 [shape = 'u8[2048]{0}', space=vmem, size = 0x800, scoped, tag = 'output window, operand 0, single buffered']
    #allocation3 [shape = 's32[1]{0}', space=sflag, size = 0x4, scoped, tag = 'scoped memory for tpu_custom_call.1']
    %12 = vsyncpa [#allocation3], 0
    // Predicated region
    $region2: #{tpu_custom_call.1} parent=1 // pred_check
      _
    $region3: #{tpu_custom_call.1} parent=1 // pred_check_branch
      %14 = sbr.rel (0) target = $region5
    $region4: #{tpu_custom_call.1} parent=1 // pred_region
      _
    $region5: #{tpu_custom_call.1} parent=1 // pred_fallthru
      _
    // Predicated region
    $region6: #{tpu_custom_call.1} parent=1 // pred_check
      _
    $region7: #{tpu_custom_call.1} parent=1 // pred_check_branch
      %16 = sbr.rel (0) target = $region9
    $region8: #{tpu_custom_call.1} parent=1 // pred_region
      _
    $region9: #{tpu_custom_call.1} parent=1 // pred_fallthru
      _
    // Predicated region
    $region10: #{tpu_custom_call.1} parent=1 // pred_check
      _
    $region11: #{tpu_custom_call.1} parent=1 // pred_check_branch
      %18 = sbr.rel (0) target = $region13
    $region12: #{tpu_custom_call.1} parent=1 // pred_region
      _
    $region13: #{tpu_custom_call.1} parent=1 // pred_fallthru
      _
    // Predicated region
    $region14: #{tpu_custom_call.1} parent=1 // pred_check
      _
    $region15: #{tpu_custom_call.1} parent=1 // pred_check_branch
      %20 = sbr.rel (0) target = $region17
    $region16: #{tpu_custom_call.1} parent=1 // pred_region
      _
    $region17: #{tpu_custom_call.1} parent=1 // pred_fallthru
      _
    // Predicated region
    $region18: #{tpu_custom_call.1} parent=1 // pred_check
      _
    $region19: #{tpu_custom_call.1} parent=1 // pred_check_branch
      %22 = sbr.rel (0) target = $region21
    $region20: #{tpu_custom_call.1} parent=1 // pred_region
      _
    $region21: #{tpu_custom_call.1} parent=1 // pred_fallthru
      _
    // Predicated region
    $region22: #{tpu_custom_call.1} parent=1 // pred_check
      _
    $region23: #{tpu_custom_call.1} parent=1 // pred_check_branch
      %24 = sbr.rel (0) target = $region25
    $region24: #{tpu_custom_call.1} parent=1 // pred_region
      _
    $region25: #{tpu_custom_call.1} parent=1 // pred_fallthru
      _
    // Predicated region
    $region26: #{tpu_custom_call.1} parent=1 // pred_check
      _
    $region27: #{tpu_custom_call.1} parent=1 // pred_check_branch
      %26 = sbr.rel (0) target = $region29
    $region28: #{tpu_custom_call.1} parent=1 // pred_region
      _
    $region29: #{tpu_custom_call.1} parent=1 // pred_fallthru
      _
    %v27 = vld [vmem:[%s1] sm:$0xff]
    %v28 = vld [vmem:[%s1 + $0x8] sm:$0xff]
    %v29 = vld [vmem:[%s1 + $0x10] sm:$0xff]
    %v30 = vld [vmem:[%s1 + $0x18] sm:$0xff]
    %v31 = vld [vmem:[%s0] sm:$0xf]
    %v32 = vld [vmem:[%s2] sm:$0xff]
    %v33 = vld [vmem:[%s2 + $0x8] sm:$0xff]
    %v34 = vld [vmem:[%s2 + $0x10] sm:$0xff]
    %v35 = vld [vmem:[%s2 + $0x18] sm:$0xff]
    %37 = vset.pattern.permute.xlu0 0
    %38 = vperm.xlu0 %37, %v32
    %v39 = vpop.permute.xlu0 %38
    %42 = vset.pattern.permute.xlu0 0
    %43 = vperm.xlu0 %42, %v33
    %v44 = vpop.permute.xlu0 %43
    %47 = vset.pattern.permute.xlu0 0
    %48 = vperm.xlu0 %47, %v34
    %v49 = vpop.permute.xlu0 %48
    %52 = vset.pattern.permute.xlu0 0
    %53 = vperm.xlu0 %52, %v35
    %v54 = vpop.permute.xlu0 %53
    %vm56 = vcmask 31744
    %v58 = vsel %vm56, %v27, 0
    %v61 = vsel %vm56, %v28, 0
    %v64 = vsel %vm56, %v29, 0
    %v67 = vsel %vm56, %v30, 0
    %vm69 = vcmask 1043456
    %v71 = vsel %vm69, %v31, 0
    %73 = vmatprep.subr.mxu0 0.0
    %74 = vmatpush1.msra.mxu0 %v71
    %75 = vmatprep.subr.mxu0 0.0
    %76 = vmatpush1.msra.mxu0 0.0
    %77 = vmatprep.subr.mxu0 0.0
    %78 = vmatpush1.msra.mxu0 0.0
    %79 = vmatprep.subr.mxu0 0.0
    %80 = vmatpush1.msra.mxu0 0.0
    %81 = vmatprep.subr.mxu0 0.0
    %82 = vmatpush1.msra.mxu0 0.0
    %83 = vmatprep.subr.mxu0 0.0
    %84 = vmatpush1.msra.mxu0 0.0
    %85 = vmatprep.subr.mxu0 0.0
    %86 = vmatpush1.msra.mxu0 0.0
    %87 = vmatprep.subr.mxu0 0.0
    %88 = vmatpush1.msra.mxu0 0.0
    %89 = vmatprep.subr.mxu0 0.0
    %90 = vmatpush1.msra.mxu0 0.0
    %91 = vmatprep.subr.mxu0 0.0
    %92 = vmatpush1.msra.mxu0 0.0
    %93 = vmatprep.subr.mxu0 0.0
    %94 = vmatpush1.msra.mxu0 0.0
    %95 = vmatprep.subr.mxu0 0.0
    %96 = vmatpush1.msra.mxu0 0.0
    %97 = vmatprep.subr.mxu0 0.0
    %98 = vmatpush1.msra.mxu0 0.0
    %99 = vmatprep.subr.mxu0 0.0
    %100 = vmatpush1.msra.mxu0 0.0
    %101 = vmatprep.subr.mxu0 0.0
    %102 = vmatpush1.msra.mxu0 0.0
    %103 = vmatprep.subr.mxu0 0.0
    %104 = vmatpush1.msra.mxu0 0.0
    %105 = vmatprep.subr.mxu0 0.0
    %106 = vmatpush1.msra.mxu0 0.0
    %107 = vmatprep.subr.mxu0 0.0
    %108 = vmatpush1.msra.mxu0 0.0
    %109 = vmatprep.subr.mxu0 0.0
    %110 = vmatpush1.msra.mxu0 0.0
    %111 = vmatprep.subr.mxu0 0.0
    %112 = vmatpush1.msra.mxu0 0.0
    %113 = vmatprep.subr.mxu0 0.0
    %114 = vmatpush1.msra.mxu0 0.0
    %115 = vmatprep.subr.mxu0 0.0
    %116 = vmatpush1.msra.mxu0 0.0
    %117 = vmatprep.subr.mxu0 0.0
    %118 = vmatpush1.msra.mxu0 0.0
    %119 = vmatprep.subr.mxu0 0.0
    %120 = vmatpush1.msra.mxu0 0.0
    %121 = vmatprep.subr.mxu0 0.0
    %122 = vmatpush1.msra.mxu0 0.0
    %123 = vmatprep.subr.mxu0 0.0
    %124 = vmatpush1.msra.mxu0 0.0
    %125 = vmatprep.subr.mxu0 0.0
    %126 = vmatpush1.msra.mxu0 0.0
    %127 = vmatprep.subr.mxu0 0.0
    %128 = vmatpush1.msra.mxu0 0.0
    %129 = vmatprep.subr.mxu0 0.0
    %130 = vmatpush1.msra.mxu0 0.0
    %131 = vmatprep.subr.mxu0 0.0
    %132 = vmatpush1.msra.mxu0 0.0
    %133 = vmatprep.subr.mxu0 0.0
    %134 = vmatpush1.msra.mxu0 0.0
    %135 = vmatprep.subr.mxu0 0.0
    %136 = vmatpush1.msra.mxu0 0.0
    %137 = vmatprep.mubr.f32.mxu0 0.0
    %138 = vmatmul.mubr.f32.gmra.mrb[0].mxu0 %v58
    %v139 = vpop.f32.mrb[0].mxu0
    %v140 = vadd.f32 %v39, %v139
    %v141 = vpop.f32.mrb[0].mxu0
    %142 = vmatprep.mubr.f32.mxu0 0.0
    %143 = vmatmul.mubr.f32.gmra.mrb[0].mxu0 %v61
    %v144 = vpop.f32.mrb[0].mxu0
    %v145 = vadd.f32 %v44, %v144
    %v146 = vpop.f32.mrb[0].mxu0
    %147 = vmatprep.mubr.f32.mxu0 0.0
    %148 = vmatmul.mubr.f32.gmra.mrb[0].mxu0 %v64
    %v149 = vpop.f32.mrb[0].mxu0
    %v150 = vadd.f32 %v49, %v149
    %v151 = vpop.f32.mrb[0].mxu0
    %152 = vmatprep.mubr.f32.mxu0 0.0
    %153 = vmatmul.mubr.f32.gmra.mrb[0].mxu0 %v67
    %v154 = vpop.f32.mrb[0].mxu0
    %v155 = vadd.f32 %v54, %v154
    %v156 = vpop.f32.mrb[0].mxu0
    %157 = vdwg.mxu0
    %v158 = vmin.f32 %v140, %v145
    %v159 = vmin.f32 %v150, %v155
    %v160 = vmin.f32 %v158, %v159
    %v161 = vrot.slane %v160, 4
    %v162 = vmin.f32 %v160, %v161
    %v163 = vrot.slane %v162, 2
    %v164 = vmin.f32 %v162, %v163
    %v165 = vrot.slane %v164, 1
    %v166 = vmin.f32 %v164, %v165
    %v167 = vmax.f32 %v140, %v145
    %v168 = vmax.f32 %v150, %v155
    %v169 = vmax.f32 %v167, %v168
    %v170 = vrot.slane %v169, 4
    %v171 = vmax.f32 %v169, %v170
    %v172 = vrot.slane %v171, 2
    %v173 = vmax.f32 %v171, %v172
    %v174 = vrot.slane %v173, 1
    %v175 = vmax.f32 %v173, %v174
    %v176 = vsub.f32 %v140, %v166
    %v177 = vsub.f32 %v145, %v166
    %v178 = vsub.f32 %v150, %v166
    %v179 = vsub.f32 %v155, %v166
    %v180 = vsub.f32 %v175, %v166
    %v181 = vrcp.pop %v180
    %v182 = vmul.f32 %v176, %v181
    %v183 = vmul.f32 %v177, %v181
    %v184 = vmul.f32 %v178, %v181
    %v185 = vmul.f32 %v179, %v181
    %vm186 = vcmp.ge.f32.partialorder %v182, 0.0
    %vm187 = vcmp.ge.f32.partialorder %v183, 0.0
    %vm188 = vcmp.ge.f32.partialorder %v184, 0.0
    %vm189 = vcmp.ge.f32.partialorder %v185, 0.0
    %vm190 = vcmp.lt.f32.partialorder %v182, 0.2
    %vm191 = vcmp.lt.f32.partialorder %v183, 0.2
    %vm192 = vcmp.lt.f32.partialorder %v184, 0.2
    %vm193 = vcmp.lt.f32.partialorder %v185, 0.2
    %vm194 = vmand %vm186, %vm190
    %vm195 = vmand %vm187, %vm191
    %vm196 = vmand %vm188, %vm192
    %vm197 = vmand %vm189, %vm193
    %v198 = vsel %vm194, 1, 0
    %v199 = vsel %vm195, 1, 0
    %v200 = vsel %vm196, 1, 0
    %v201 = vsel %vm197, 1, 0
    %v202 = vcvt.s32.f32 %v198
    %v203 = vcvt.s32.f32 %v199
    %v204 = vcvt.s32.f32 %v200
    %v205 = vcvt.s32.f32 %v201
    %vm206 = vcmp.ge.f32.partialorder %v182, 0.2
    %vm207 = vcmp.ge.f32.partialorder %v183, 0.2
    %vm208 = vcmp.ge.f32.partialorder %v184, 0.2
    %vm209 = vcmp.ge.f32.partialorder %v185, 0.2
    %vm210 = vcmp.lt.f32.partialorder %v182, 0.4
    %vm211 = vcmp.lt.f32.partialorder %v183, 0.4
    %vm212 = vcmp.lt.f32.partialorder %v184, 0.4
    %vm213 = vcmp.lt.f32.partialorder %v185, 0.4
    %vm214 = vmand %vm206, %vm210
    %vm215 = vmand %vm207, %vm211
    %vm216 = vmand %vm208, %vm212
    %vm217 = vmand %vm209, %vm213
    %v218 = vsel %vm214, 1, 0
    %v219 = vsel %vm215, 1, 0
    %v220 = vsel %vm216, 1, 0
    %v221 = vsel %vm217, 1, 0
    %v222 = vcvt.s32.f32 %v218
    %v223 = vcvt.s32.f32 %v219
    %v224 = vcvt.s32.f32 %v220
    %v225 = vcvt.s32.f32 %v221
    %vm226 = vcmp.ge.f32.partialorder %v182, 0.4
    %vm227 = vcmp.ge.f32.partialorder %v183, 0.4
    %vm228 = vcmp.ge.f32.partialorder %v184, 0.4
    %vm229 = vcmp.ge.f32.partialorder %v185, 0.4
    %vm230 = vcmp.lt.f32.partialorder %v182, 0.6
    %vm231 = vcmp.lt.f32.partialorder %v183, 0.6
    %vm232 = vcmp.lt.f32.partialorder %v184, 0.6
    %vm233 = vcmp.lt.f32.partialorder %v185, 0.6
    %vm234 = vmand %vm226, %vm230
    %vm235 = vmand %vm227, %vm231
    %vm236 = vmand %vm228, %vm232
    %vm237 = vmand %vm229, %vm233
    %v238 = vsel %vm234, 1, 0
    %v239 = vsel %vm235, 1, 0
    %v240 = vsel %vm236, 1, 0
    %v241 = vsel %vm237, 1, 0
    %v242 = vcvt.s32.f32 %v238
    %v243 = vcvt.s32.f32 %v239
    %v244 = vcvt.s32.f32 %v240
    %v245 = vcvt.s32.f32 %v241
    %vm246 = vcmp.ge.f32.partialorder %v182, 0.6
    %vm247 = vcmp.ge.f32.partialorder %v183, 0.6
    %vm248 = vcmp.ge.f32.partialorder %v184, 0.6
    %vm249 = vcmp.ge.f32.partialorder %v185, 0.6
    %vm250 = vcmp.lt.f32.partialorder %v182, 0.8
    %vm251 = vcmp.lt.f32.partialorder %v183, 0.8
    %vm252 = vcmp.lt.f32.partialorder %v184, 0.8
    %vm253 = vcmp.lt.f32.partialorder %v185, 0.8
    %vm254 = vmand %vm246, %vm250
    %vm255 = vmand %vm247, %vm251
    %vm256 = vmand %vm248, %vm252
    %vm257 = vmand %vm249, %vm253
    %v258 = vsel %vm254, 1, 0
    %v259 = vsel %vm255, 1, 0
    %v260 = vsel %vm256, 1, 0
    %v261 = vsel %vm257, 1, 0
    %v262 = vcvt.s32.f32 %v258
    %v263 = vcvt.s32.f32 %v259
    %v264 = vcvt.s32.f32 %v260
    %v265 = vcvt.s32.f32 %v261
    %vm266 = vcmp.ge.f32.partialorder %v182, 0.8
    %vm267 = vcmp.ge.f32.partialorder %v183, 0.8
    %vm268 = vcmp.ge.f32.partialorder %v184, 0.8
    %vm269 = vcmp.ge.f32.partialorder %v185, 0.8
    %vm270 = vcmp.lt.f32.partialorder %v182, 1.0
    %vm271 = vcmp.lt.f32.partialorder %v183, 1.0
    %vm272 = vcmp.lt.f32.partialorder %v184, 1.0
    %vm273 = vcmp.lt.f32.partialorder %v185, 1.0
    %vm274 = vmand %vm266, %vm270
    %vm275 = vmand %vm267, %vm271
    %vm276 = vmand %vm268, %vm272
    %vm277 = vmand %vm269, %vm273
    %v278 = vsel %vm274, 1, 0
    %v279 = vsel %vm275, 1, 0
    %v280 = vsel %vm276, 1, 0
    %v281 = vsel %vm277, 1, 0
    %v282 = vcvt.s32.f32 %v278
    %v283 = vcvt.s32.f32 %v279
    %v284 = vcvt.s32.f32 %v280
    %v285 = vcvt.s32.f32 %v281
    %v286 = vsub.f32 0.2, %v182
    %v287 = vsub.f32 0.2, %v183
    %v288 = vsub.f32 0.2, %v184
    %v289 = vsub.f32 0.2, %v185
    %v290 = vmul.f32 %v286, 5.0
    %v291 = vmul.f32 %v287, 5.0
    %v292 = vmul.f32 %v288, 5.0
    %v293 = vmul.f32 %v289, 5.0
    %v294 = vmul.f32 %v290, %v202
    %v295 = vmul.f32 %v291, %v203
    %v296 = vmul.f32 %v292, %v204
    %v297 = vmul.f32 %v293, %v205
    %v298 = vmul.f32 %v182, 5.0
    %v299 = vmul.f32 %v183, 5.0
    %v300 = vmul.f32 %v184, 5.0
    %v301 = vmul.f32 %v185, 5.0
    %v302 = vmul.f32 %v298, %v202
    %v303 = vmul.f32 %v299, %v203
    %v304 = vmul.f32 %v300, %v204
    %v305 = vmul.f32 %v301, %v205
    %v306 = vsub.f32 0.4, %v182
    %v307 = vsub.f32 0.4, %v183
    %v308 = vsub.f32 0.4, %v184
    %v309 = vsub.f32 0.4, %v185
    %v310 = vmul.f32 %v306, 5.0
    %v311 = vmul.f32 %v307, 5.0
    %v312 = vmul.f32 %v308, 5.0
    %v313 = vmul.f32 %v309, 5.0
    %v314 = vmul.f32 %v310, %v222
    %v315 = vmul.f32 %v311, %v223
    %v316 = vmul.f32 %v312, %v224
    %v317 = vmul.f32 %v313, %v225
    %v318 = vadd.f32 %v302, %v314
    %v319 = vadd.f32 %v303, %v315
    %v320 = vadd.f32 %v304, %v316
    %v321 = vadd.f32 %v305, %v317
    %v322 = vsub.f32 %v182, 0.2
    %v323 = vsub.f32 %v183, 0.2
    %v324 = vsub.f32 %v184, 0.2
    %v325 = vsub.f32 %v185, 0.2
    %v326 = vmul.f32 %v322, 5.0
    %v327 = vmul.f32 %v323, 5.0
    %v328 = vmul.f32 %v324, 5.0
    %v329 = vmul.f32 %v325, 5.0
    %v330 = vmul.f32 %v326, %v222
    %v331 = vmul.f32 %v327, %v223
    %v332 = vmul.f32 %v328, %v224
    %v333 = vmul.f32 %v329, %v225
    %v334 = vsub.f32 0.6, %v182
    %v335 = vsub.f32 0.6, %v183
    %v336 = vsub.f32 0.6, %v184
    %v337 = vsub.f32 0.6, %v185
    %v338 = vmul.f32 %v334, 5.0
    %v339 = vmul.f32 %v335, 5.0
    %v340 = vmul.f32 %v336, 5.0
    %v341 = vmul.f32 %v337, 5.0
    %v342 = vmul.f32 %v338, %v242
    %v343 = vmul.f32 %v339, %v243
    %v344 = vmul.f32 %v340, %v244
    %v345 = vmul.f32 %v341, %v245
    %v346 = vadd.f32 %v330, %v342
    %v347 = vadd.f32 %v331, %v343
    %v348 = vadd.f32 %v332, %v344
    %v349 = vadd.f32 %v333, %v345
    %v350 = vsub.f32 %v182, 0.4
    %v351 = vsub.f32 %v183, 0.4
    %v352 = vsub.f32 %v184, 0.4
    %v353 = vsub.f32 %v185, 0.4
    %v354 = vmul.f32 %v350, 5.0
    %v355 = vmul.f32 %v351, 5.0
    %v356 = vmul.f32 %v352, 5.0
    %v357 = vmul.f32 %v353, 5.0
    %v358 = vmul.f32 %v354, %v242
    %v359 = vmul.f32 %v355, %v243
    %v360 = vmul.f32 %v356, %v244
    %v361 = vmul.f32 %v357, %v245
    %v362 = vsub.f32 0.8, %v182
    %v363 = vsub.f32 0.8, %v183
    %v364 = vsub.f32 0.8, %v184
    %v365 = vsub.f32 0.8, %v185
    %v366 = vmul.f32 %v362, 5.0
    %v367 = vmul.f32 %v363, 5.0
    %v368 = vmul.f32 %v364, 5.0
    %v369 = vmul.f32 %v365, 5.0
    %v370 = vmul.f32 %v366, %v262
    %v371 = vmul.f32 %v367, %v263
    %v372 = vmul.f32 %v368, %v264
    %v373 = vmul.f32 %v369, %v265
    %v374 = vadd.f32 %v358, %v370
    %v375 = vadd.f32 %v359, %v371
    %v376 = vadd.f32 %v360, %v372
    %v377 = vadd.f32 %v361, %v373
    %v378 = vsub.f32 %v182, 0.6
    %v379 = vsub.f32 %v183, 0.6
    %v380 = vsub.f32 %v184, 0.6
    %v381 = vsub.f32 %v185, 0.6
    %v382 = vmul.f32 %v378, 5.0
    %v383 = vmul.f32 %v379, 5.0
    %v384 = vmul.f32 %v380, 5.0
    %v385 = vmul.f32 %v381, 5.0
    %v386 = vmul.f32 %v382, %v262
    %v387 = vmul.f32 %v383, %v263
    %v388 = vmul.f32 %v384, %v264
    %v389 = vmul.f32 %v385, %v265
    %v390 = vsub.f32 1.0, %v182
    %v391 = vsub.f32 1.0, %v183
    %v392 = vsub.f32 1.0, %v184
    %v393 = vsub.f32 1.0, %v185
    %v394 = vmul.f32 %v390, 5.0
    %v395 = vmul.f32 %v391, 5.0
    %v396 = vmul.f32 %v392, 5.0
    %v397 = vmul.f32 %v393, 5.0
    %v398 = vmul.f32 %v394, %v282
    %v399 = vmul.f32 %v395, %v283
    %v400 = vmul.f32 %v396, %v284
    %v401 = vmul.f32 %v397, %v285
    %v402 = vadd.f32 %v386, %v398
    %v403 = vadd.f32 %v387, %v399
    %v404 = vadd.f32 %v388, %v400
    %v405 = vadd.f32 %v389, %v401
    %v406 = vsub.f32 %v182, 0.8
    %v407 = vsub.f32 %v183, 0.8
    %v408 = vsub.f32 %v184, 0.8
    %v409 = vsub.f32 %v185, 0.8
    %v410 = vmul.f32 %v406, 5.0
    %v411 = vmul.f32 %v407, 5.0
    %v412 = vmul.f32 %v408, 5.0
    %v413 = vmul.f32 %v409, 5.0
    %v414 = vmul.f32 %v410, %v282
    %v415 = vmul.f32 %v411, %v283
    %v416 = vmul.f32 %v412, %v284
    %v417 = vmul.f32 %v413, %v285
    %v418 = vmul.f32 %v290, %v294
    %v419 = vmul.f32 %v291, %v295
    %v420 = vmul.f32 %v292, %v296
    %v421 = vmul.f32 %v293, %v297
    %v422 = vmul.f32 %v298, %v294
    %v423 = vmul.f32 %v299, %v295
    %v424 = vmul.f32 %v300, %v296
    %v425 = vmul.f32 %v301, %v297
    %v426 = vmul.f32 %v306, 2.5
    %v427 = vmul.f32 %v307, 2.5
    %v428 = vmul.f32 %v308, 2.5
    %v429 = vmul.f32 %v309, 2.5
    %v430 = vmul.f32 %v426, %v318
    %v431 = vmul.f32 %v427, %v319
    %v432 = vmul.f32 %v428, %v320
    %v433 = vmul.f32 %v429, %v321
    %v434 = vadd.f32 %v422, %v430
    %v435 = vadd.f32 %v423, %v431
    %v436 = vadd.f32 %v424, %v432
    %v437 = vadd.f32 %v425, %v433
    %v438 = vmul.f32 %v182, 2.5
    %v439 = vmul.f32 %v183, 2.5
    %v440 = vmul.f32 %v184, 2.5
    %v441 = vmul.f32 %v185, 2.5
    %v442 = vmul.f32 %v438, %v318
    %v443 = vmul.f32 %v439, %v319
    %v444 = vmul.f32 %v440, %v320
    %v445 = vmul.f32 %v441, %v321
    %v446 = vmul.f32 %v334, 2.5
    %v447 = vmul.f32 %v335, 2.5
    %v448 = vmul.f32 %v336, 2.5
    %v449 = vmul.f32 %v337, 2.5
    %v450 = vmul.f32 %v446, %v346
    %v451 = vmul.f32 %v447, %v347
    %v452 = vmul.f32 %v448, %v348
    %v453 = vmul.f32 %v449, %v349
    %v454 = vadd.f32 %v442, %v450
    %v455 = vadd.f32 %v443, %v451
    %v456 = vadd.f32 %v444, %v452
    %v457 = vadd.f32 %v445, %v453
    %v458 = vmul.f32 %v322, 2.5
    %v459 = vmul.f32 %v323, 2.5
    %v460 = vmul.f32 %v324, 2.5
    %v461 = vmul.f32 %v325, 2.5
    %v462 = vmul.f32 %v458, %v346
    %v463 = vmul.f32 %v459, %v347
    %v464 = vmul.f32 %v460, %v348
    %v465 = vmul.f32 %v461, %v349
    %v466 = vmul.f32 %v362, 2.5
    %v467 = vmul.f32 %v363, 2.5
    %v468 = vmul.f32 %v364, 2.5
    %v469 = vmul.f32 %v365, 2.5
    %v470 = vmul.f32 %v466, %v374
    %v471 = vmul.f32 %v467, %v375
    %v472 = vmul.f32 %v468, %v376
    %v473 = vmul.f32 %v469, %v377
    %v474 = vadd.f32 %v462, %v470
    %v475 = vadd.f32 %v463, %v471
    %v476 = vadd.f32 %v464, %v472
    %v477 = vadd.f32 %v465, %v473
    %v478 = vmul.f32 %v350, 2.5
    %v479 = vmul.f32 %v351, 2.5
    %v480 = vmul.f32 %v352, 2.5
    %v481 = vmul.f32 %v353, 2.5
    %v482 = vmul.f32 %v478, %v374
    %v483 = vmul.f32 %v479, %v375
    %v484 = vmul.f32 %v480, %v376
    %v485 = vmul.f32 %v481, %v377
    %v486 = vmul.f32 %v390, 2.5
    %v487 = vmul.f32 %v391, 2.5
    %v488 = vmul.f32 %v392, 2.5
    %v489 = vmul.f32 %v393, 2.5
    %v490 = vmul.f32 %v486, %v402
    %v491 = vmul.f32 %v487, %v403
    %v492 = vmul.f32 %v488, %v404
    %v493 = vmul.f32 %v489, %v405
    %v494 = vadd.f32 %v482, %v490
    %v495 = vadd.f32 %v483, %v491
    %v496 = vadd.f32 %v484, %v492
    %v497 = vadd.f32 %v485, %v493
    %v498 = vmul.f32 %v378, 2.5
    %v499 = vmul.f32 %v379, 2.5
    %v500 = vmul.f32 %v380, 2.5
    %v501 = vmul.f32 %v381, 2.5
    %v502 = vmul.f32 %v498, %v402
    %v503 = vmul.f32 %v499, %v403
    %v504 = vmul.f32 %v500, %v404
    %v505 = vmul.f32 %v501, %v405
    %v506 = vmul.f32 %v394, %v414
    %v507 = vmul.f32 %v395, %v415
    %v508 = vmul.f32 %v396, %v416
    %v509 = vmul.f32 %v397, %v417
    %v510 = vadd.f32 %v502, %v506
    %v511 = vadd.f32 %v503, %v507
    %v512 = vadd.f32 %v504, %v508
    %v513 = vadd.f32 %v505, %v509
    %v514 = vmul.f32 %v410, %v414
    %v515 = vmul.f32 %v411, %v415
    %v516 = vmul.f32 %v412, %v416
    %v517 = vmul.f32 %v413, %v417
    %v518 = vmul.f32 %v290, %v418
    %v519 = vmul.f32 %v291, %v419
    %v520 = vmul.f32 %v292, %v420
    %v521 = vmul.f32 %v293, %v421
    %v522 = vmul.f32 %v298, %v418
    %v523 = vmul.f32 %v299, %v419
    %v524 = vmul.f32 %v300, %v420
    %v525 = vmul.f32 %v301, %v421
    %v526 = vmul.f32 %v426, %v434
    %v527 = vmul.f32 %v427, %v435
    %v528 = vmul.f32 %v428, %v436
    %v529 = vmul.f32 %v429, %v437
    %v530 = vadd.f32 %v522, %v526
    %v531 = vadd.f32 %v523, %v527
    %v532 = vadd.f32 %v524, %v528
    %v533 = vadd.f32 %v525, %v529
    %v534 = vmul.f32 %v438, %v434
    %v535 = vmul.f32 %v439, %v435
    %v536 = vmul.f32 %v440, %v436
    %v537 = vmul.f32 %v441, %v437
    %v538 = vmul.f32 %v334, 1.6666666
    %v539 = vmul.f32 %v335, 1.6666666
    %v540 = vmul.f32 %v336, 1.6666666
    %v541 = vmul.f32 %v337, 1.6666666
    %v542 = vmul.f32 %v538, %v454
    %v543 = vmul.f32 %v539, %v455
    %v544 = vmul.f32 %v540, %v456
    %v545 = vmul.f32 %v541, %v457
    %v546 = vadd.f32 %v534, %v542
    %v547 = vadd.f32 %v535, %v543
    %v548 = vadd.f32 %v536, %v544
    %v549 = vadd.f32 %v537, %v545
    %v550 = vmul.f32 %v182, 1.6666666
    %v551 = vmul.f32 %v183, 1.6666666
    %v552 = vmul.f32 %v184, 1.6666666
    %v553 = vmul.f32 %v185, 1.6666666
    %v554 = vmul.f32 %v550, %v454
    %v555 = vmul.f32 %v551, %v455
    %v556 = vmul.f32 %v552, %v456
    %v557 = vmul.f32 %v553, %v457
    %v558 = vmul.f32 %v362, 1.6666666
    %v559 = vmul.f32 %v363, 1.6666666
    %v560 = vmul.f32 %v364, 1.6666666
    %v561 = vmul.f32 %v365, 1.6666666
    %v562 = vmul.f32 %v558, %v474
    %v563 = vmul.f32 %v559, %v475
    %v564 = vmul.f32 %v560, %v476
    %v565 = vmul.f32 %v561, %v477
    %v566 = vadd.f32 %v554, %v562
    %v567 = vadd.f32 %v555, %v563
    %v568 = vadd.f32 %v556, %v564
    %v569 = vadd.f32 %v557, %v565
    %v570 = vmul.f32 %v322, 1.6666666
    %v571 = vmul.f32 %v323, 1.6666666
    %v572 = vmul.f32 %v324, 1.6666666
    %v573 = vmul.f32 %v325, 1.6666666
    %v574 = vmul.f32 %v570, %v474
    %v575 = vmul.f32 %v571, %v475
    %v576 = vmul.f32 %v572, %v476
    %v577 = vmul.f32 %v573, %v477
    %v578 = vmul.f32 %v390, 1.6666666
    %v579 = vmul.f32 %v391, 1.6666666
    %v580 = vmul.f32 %v392, 1.6666666
    %v581 = vmul.f32 %v393, 1.6666666
    %v582 = vmul.f32 %v578, %v494
    %v583 = vmul.f32 %v579, %v495
    %v584 = vmul.f32 %v580, %v496
    %v585 = vmul.f32 %v581, %v497
    %v586 = vadd.f32 %v574, %v582
    %v587 = vadd.f32 %v575, %v583
    %v588 = vadd.f32 %v576, %v584
    %v589 = vadd.f32 %v577, %v585
    %v590 = vmul.f32 %v350, 1.6666666
    %v591 = vmul.f32 %v351, 1.6666666
    %v592 = vmul.f32 %v352, 1.6666666
    %v593 = vmul.f32 %v353, 1.6666666
    %v594 = vmul.f32 %v590, %v494
    %v595 = vmul.f32 %v591, %v495
    %v596 = vmul.f32 %v592, %v496
    %v597 = vmul.f32 %v593, %v497
    %v598 = vmul.f32 %v486, %v510
    %v599 = vmul.f32 %v487, %v511
    %v600 = vmul.f32 %v488, %v512
    %v601 = vmul.f32 %v489, %v513
    %v602 = vadd.f32 %v594, %v598
    %v603 = vadd.f32 %v595, %v599
    %v604 = vadd.f32 %v596, %v600
    %v605 = vadd.f32 %v597, %v601
    %v606 = vmul.f32 %v498, %v510
    %v607 = vmul.f32 %v499, %v511
    %v608 = vmul.f32 %v500, %v512
    %v609 = vmul.f32 %v501, %v513
    %v610 = vmul.f32 %v394, %v514
    %v611 = vmul.f32 %v395, %v515
    %v612 = vmul.f32 %v396, %v516
    %v613 = vmul.f32 %v397, %v517
    %v614 = vadd.f32 %v606, %v610
    %v615 = vadd.f32 %v607, %v611
    %v616 = vadd.f32 %v608, %v612
    %v617 = vadd.f32 %v609, %v613
    %v618 = vmul.f32 %v410, %v514
    %v619 = vmul.f32 %v411, %v515
    %v620 = vmul.f32 %v412, %v516
    %v621 = vmul.f32 %v413, %v517
    %v622 = vld [vmem:[%s3] sm:$0xff]
    %v623 = vld [vmem:[%s3 + $0x8] sm:$0xff]
    %v624 = vld [vmem:[%s3 + $0x10] sm:$0xff]
    %v625 = vld [vmem:[%s3 + $0x18] sm:$0xff]
    %627 = vset.pattern.permute.xlu0 0
    %628 = vperm.xlu0 %627, %v622
    %v629 = vpop.permute.xlu0 %628
    %632 = vset.pattern.permute.xlu0 0
    %633 = vperm.xlu0 %632, %v623
    %v634 = vpop.permute.xlu0 %633
    %637 = vset.pattern.permute.xlu0 0
    %638 = vperm.xlu0 %637, %v624
    %v639 = vpop.permute.xlu0 %638
    %642 = vset.pattern.permute.xlu0 0
    %643 = vperm.xlu0 %642, %v625
    %v644 = vpop.permute.xlu0 %643
    %v646 = vmul.f32 %v518, %v629
    %v647 = vmul.f32 %v519, %v634
    %v648 = vmul.f32 %v520, %v639
    %v649 = vmul.f32 %v521, %v644
    %650 = vset.pattern.permute.xlu0 1
    %651 = vperm.xlu0 %650, %v622
    %v652 = vpop.permute.xlu0 %651
    %654 = vset.pattern.permute.xlu0 1
    %655 = vperm.xlu0 %654, %v623
    %v656 = vpop.permute.xlu0 %655
    %658 = vset.pattern.permute.xlu0 1
    %659 = vperm.xlu0 %658, %v624
    %v660 = vpop.permute.xlu0 %659
    %662 = vset.pattern.permute.xlu0 1
    %663 = vperm.xlu0 %662, %v625
    %v664 = vpop.permute.xlu0 %663
    %v666 = vmul.f32 %v530, %v652
    %v667 = vmul.f32 %v531, %v656
    %v668 = vmul.f32 %v532, %v660
    %v669 = vmul.f32 %v533, %v664
    %v670 = vadd.f32 %v646, %v666
    %v671 = vadd.f32 %v647, %v667
    %v672 = vadd.f32 %v648, %v668
    %v673 = vadd.f32 %v649, %v669
    %674 = vset.pattern.permute.xlu0 2
    %675 = vperm.xlu0 %674, %v622
    %v676 = vpop.permute.xlu0 %675
    %678 = vset.pattern.permute.xlu0 2
    %679 = vperm.xlu0 %678, %v623
    %v680 = vpop.permute.xlu0 %679
    %682 = vset.pattern.permute.xlu0 2
    %683 = vperm.xlu0 %682, %v624
    %v684 = vpop.permute.xlu0 %683
    %686 = vset.pattern.permute.xlu0 2
    %687 = vperm.xlu0 %686, %v625
    %v688 = vpop.permute.xlu0 %687
    %v690 = vmul.f32 %v546, %v676
    %v691 = vmul.f32 %v547, %v680
    %v692 = vmul.f32 %v548, %v684
    %v693 = vmul.f32 %v549, %v688
    %v694 = vadd.f32 %v670, %v690
    %v695 = vadd.f32 %v671, %v691
    %v696 = vadd.f32 %v672, %v692
    %v697 = vadd.f32 %v673, %v693
    %698 = vset.pattern.permute.xlu0 3
    %699 = vperm.xlu0 %698, %v622
    %v700 = vpop.permute.xlu0 %699
    %702 = vset.pattern.permute.xlu0 3
    %703 = vperm.xlu0 %702, %v623
    %v704 = vpop.permute.xlu0 %703
    %706 = vset.pattern.permute.xlu0 3
    %707 = vperm.xlu0 %706, %v624
    %v708 = vpop.permute.xlu0 %707
    %710 = vset.pattern.permute.xlu0 3
    %711 = vperm.xlu0 %710, %v625
    %v712 = vpop.permute.xlu0 %711
    %v714 = vmul.f32 %v566, %v700
    %v715 = vmul.f32 %v567, %v704
    %v716 = vmul.f32 %v568, %v708
    %v717 = vmul.f32 %v569, %v712
    %v718 = vadd.f32 %v694, %v714
    %v719 = vadd.f32 %v695, %v715
    %v720 = vadd.f32 %v696, %v716
    %v721 = vadd.f32 %v697, %v717
    %722 = vset.pattern.permute.xlu0 4
    %723 = vperm.xlu0 %722, %v622
    %v724 = vpop.permute.xlu0 %723
    %726 = vset.pattern.permute.xlu0 4
    %727 = vperm.xlu0 %726, %v623
    %v728 = vpop.permute.xlu0 %727
    %730 = vset.pattern.permute.xlu0 4
    %731 = vperm.xlu0 %730, %v624
    %v732 = vpop.permute.xlu0 %731
    %734 = vset.pattern.permute.xlu0 4
    %735 = vperm.xlu0 %734, %v625
    %v736 = vpop.permute.xlu0 %735
    %v738 = vmul.f32 %v586, %v724
    %v739 = vmul.f32 %v587, %v728
    %v740 = vmul.f32 %v588, %v732
    %v741 = vmul.f32 %v589, %v736
    %v742 = vadd.f32 %v718, %v738
    %v743 = vadd.f32 %v719, %v739
    %v744 = vadd.f32 %v720, %v740
    %v745 = vadd.f32 %v721, %v741
    %746 = vset.pattern.permute.xlu0 5
    %747 = vperm.xlu0 %746, %v622
    %v748 = vpop.permute.xlu0 %747
    %750 = vset.pattern.permute.xlu0 5
    %751 = vperm.xlu0 %750, %v623
    %v752 = vpop.permute.xlu0 %751
    %754 = vset.pattern.permute.xlu0 5
    %755 = vperm.xlu0 %754, %v624
    %v756 = vpop.permute.xlu0 %755
    %758 = vset.pattern.permute.xlu0 5
    %759 = vperm.xlu0 %758, %v625
    %v760 = vpop.permute.xlu0 %759
    %v762 = vmul.f32 %v602, %v748
    %v763 = vmul.f32 %v603, %v752
    %v764 = vmul.f32 %v604, %v756
    %v765 = vmul.f32 %v605, %v760
    %v766 = vadd.f32 %v742, %v762
    %v767 = vadd.f32 %v743, %v763
    %v768 = vadd.f32 %v744, %v764
    %v769 = vadd.f32 %v745, %v765
    %770 = vset.pattern.permute.xlu0 6
    %771 = vperm.xlu0 %770, %v622
    %v772 = vpop.permute.xlu0 %771
    %774 = vset.pattern.permute.xlu0 6
    %775 = vperm.xlu0 %774, %v623
    %v776 = vpop.permute.xlu0 %775
    %778 = vset.pattern.permute.xlu0 6
    %779 = vperm.xlu0 %778, %v624
    %v780 = vpop.permute.xlu0 %779
    %782 = vset.pattern.permute.xlu0 6
    %783 = vperm.xlu0 %782, %v625
    %v784 = vpop.permute.xlu0 %783
    %v786 = vmul.f32 %v614, %v772
    %v787 = vmul.f32 %v615, %v776
    %v788 = vmul.f32 %v616, %v780
    %v789 = vmul.f32 %v617, %v784
    %v790 = vadd.f32 %v766, %v786
    %v791 = vadd.f32 %v767, %v787
    %v792 = vadd.f32 %v768, %v788
    %v793 = vadd.f32 %v769, %v789
    %794 = vset.pattern.permute.xlu0 7
    %795 = vperm.xlu0 %794, %v622
    %v796 = vpop.permute.xlu0 %795
    %798 = vset.pattern.permute.xlu0 7
    %799 = vperm.xlu0 %798, %v623
    %v800 = vpop.permute.xlu0 %799
    %802 = vset.pattern.permute.xlu0 7
    %803 = vperm.xlu0 %802, %v624
    %v804 = vpop.permute.xlu0 %803
    %806 = vset.pattern.permute.xlu0 7
    %807 = vperm.xlu0 %806, %v625
    %v808 = vpop.permute.xlu0 %807
    %v810 = vmul.f32 %v618, %v796
    %v811 = vmul.f32 %v619, %v800
    %v812 = vmul.f32 %v620, %v804
    %v813 = vmul.f32 %v621, %v808
    %v814 = vadd.f32 %v790, %v810
    %v815 = vadd.f32 %v791, %v811
    %v816 = vadd.f32 %v792, %v812
    %v817 = vadd.f32 %v793, %v813
    %v818 = vld [vmem:[%s4] sm:$0xff]
    %v819 = vld [vmem:[%s4 + $0x8] sm:$0xff]
    %v820 = vld [vmem:[%s4 + $0x10] sm:$0xff]
    %v821 = vld [vmem:[%s4 + $0x18] sm:$0xff]
    %823 = vset.pattern.permute.xlu0 0
    %824 = vperm.xlu0 %823, %v818
    %v825 = vpop.permute.xlu0 %824
    %828 = vset.pattern.permute.xlu0 0
    %829 = vperm.xlu0 %828, %v819
    %v830 = vpop.permute.xlu0 %829
    %833 = vset.pattern.permute.xlu0 0
    %834 = vperm.xlu0 %833, %v820
    %v835 = vpop.permute.xlu0 %834
    %838 = vset.pattern.permute.xlu0 0
    %839 = vperm.xlu0 %838, %v821
    %v840 = vpop.permute.xlu0 %839
    %v842 = vadd.f32 %v814, %v825
    %v843 = vadd.f32 %v815, %v830
    %v844 = vadd.f32 %v816, %v835
    %v845 = vadd.f32 %v817, %v840
    %v846 = vld [vmem:[%s5] sm:$0xf]
    %v847 = vld [vmem:[%s6] sm:$0xf]
    %849 = vset.pattern.permute.xlu0 0
    %850 = vperm.xlu0 %849, %v847
    %v851 = vpop.permute.xlu0 %850
    %vm853 = vcmask 261120
    %v855 = vsel %vm853, %v846, 0
    %857 = vmatprep.subr.mxu0 0.0
    %858 = vmatpush1.msra.mxu0 %v842
    %859 = vmatprep.subr.mxu0 0.0
    %860 = vmatpush1.msra.mxu0 %v843
    %861 = vmatprep.subr.mxu0 0.0
    %862 = vmatpush1.msra.mxu0 %v844
    %863 = vmatprep.subr.mxu0 0.0
    %864 = vmatpush1.msra.mxu0 %v845
    %865 = vmatprep.subr.mxu0 0.0
    %866 = vmatpush1.msra.mxu0 0.0
    %867 = vmatprep.subr.mxu0 0.0
    %868 = vmatpush1.msra.mxu0 0.0
    %869 = vmatprep.subr.mxu0 0.0
    %870 = vmatpush1.msra.mxu0 0.0
    %871 = vmatprep.subr.mxu0 0.0
    %872 = vmatpush1.msra.mxu0 0.0
    %873 = vmatprep.subr.mxu0 0.0
    %874 = vmatpush1.msra.mxu0 0.0
    %875 = vmatprep.subr.mxu0 0.0
    %876 = vmatpush1.msra.mxu0 0.0
    %877 = vmatprep.subr.mxu0 0.0
    %878 = vmatpush1.msra.mxu0 0.0
    %879 = vmatprep.subr.mxu0 0.0
    %880 = vmatpush1.msra.mxu0 0.0
    %881 = vmatprep.subr.mxu0 0.0
    %882 = vmatpush1.msra.mxu0 0.0
    %883 = vmatprep.subr.mxu0 0.0
    %884 = vmatpush1.msra.mxu0 0.0
    %885 = vmatprep.subr.mxu0 0.0
    %886 = vmatpush1.msra.mxu0 0.0
    %887 = vmatprep.subr.mxu0 0.0
    %888 = vmatpush1.msra.mxu0 0.0
    %889 = vmatprep.subr.mxu0 0.0
    %890 = vmatpush1.msra.mxu0 0.0
    %891 = vmatprep.subr.mxu0 0.0
    %892 = vmatpush1.msra.mxu0 0.0
    %893 = vmatprep.subr.mxu0 0.0
    %894 = vmatpush1.msra.mxu0 0.0
    %895 = vmatprep.subr.mxu0 0.0
    %896 = vmatpush1.msra.mxu0 0.0
    %897 = vmatprep.subr.mxu0 0.0
    %898 = vmatpush1.msra.mxu0 0.0
    %899 = vmatprep.subr.mxu0 0.0
    %900 = vmatpush1.msra.mxu0 0.0
    %901 = vmatprep.subr.mxu0 0.0
    %902 = vmatpush1.msra.mxu0 0.0
    %903 = vmatprep.subr.mxu0 0.0
    %904 = vmatpush1.msra.mxu0 0.0
    %905 = vmatprep.subr.mxu0 0.0
    %906 = vmatpush1.msra.mxu0 0.0
    %907 = vmatprep.subr.mxu0 0.0
    %908 = vmatpush1.msra.mxu0 0.0
    %909 = vmatprep.subr.mxu0 0.0
    %910 = vmatpush1.msra.mxu0 0.0
    %911 = vmatprep.subr.mxu0 0.0
    %912 = vmatpush1.msra.mxu0 0.0
    %913 = vmatprep.subr.mxu0 0.0
    %914 = vmatpush1.msra.mxu0 0.0
    %915 = vmatprep.subr.mxu0 0.0
    %916 = vmatpush1.msra.mxu0 0.0
    %917 = vmatprep.subr.mxu0 0.0
    %918 = vmatpush1.msra.mxu0 0.0
    %919 = vmatprep.subr.mxu0 0.0
    %920 = vmatpush1.msra.mxu0 0.0
    %921 = vmatprep.mubr.f32.mxu0 0.0
    %922 = vmatmul.mubr.f32.gmra.mrb[0].mxu0 %v855
    %v923 = vpop.f32.mrb[0].mxu0
    %v924 = vadd.f32 %v851, %v923
    %v925 = vpop.f32.mrb[0].mxu0
    %926 = vdwg.mxu0
    %v927 = vmax.f32 %v924, 0.0
    %928 = vst [vmem:[#allocation2] sm:$0xf] %v927
    // Predicated region
    $region30: #{tpu_custom_call.1} parent=1 // pred_check
      _
    $region31: #{tpu_custom_call.1} parent=1 // pred_check_branch
      %930 = sbr.rel (0) target = $region33
    $region32: #{tpu_custom_call.1} parent=1 // pred_region
      %s932 = ssub.s32 64, 64
      %933 = vsyncadd [#allocation3], %s932
      %s935 = sshll.u32 [#allocation2], 4
      %s936 = int_to_ptr.vmem [resolvable:$true] %s935
      %938 = dma.vmem_to_hbm [thread:$0]  %s936, 64, %s7, [#allocation3]
    $region33: #{tpu_custom_call.1} parent=1 // pred_fallthru
      _
    // Predicated region
    $region34: #{tpu_custom_call.1} parent=1 // pred_check
      _
    $region35: #{tpu_custom_call.1} parent=1 // pred_check_branch
      %940 = sbr.rel (0) target = $region37
    $region36: #{tpu_custom_call.1} parent=1 // pred_region
      %941 = dma.done [#allocation3], 64
    $region37: #{tpu_custom_call.1} parent=1 // pred_fallthru
      _
    %942 = vsyncpa [#allocation3], 1

</llo_original>
